<compile_context>
chip_gen: v6e
topology: v6e:2x2x1
jax: 0.10.0
libtpu: 0.0.40
codegen_flags: <defaults>
</compile_context>

<pallas_src>
import functools

import jax
import jax.numpy as jnp
from jax.experimental import pallas as pl
from jax.experimental.pallas import tpu as pltpu


def _dsvdd_unc_kernel(*refs, packed, partial_sum, block_rows, total_rows):
    """One tile of DSVDD-Unc losses.

    refs = (rep_ref, rep2_ref, c_ref[, seg_ref], out_ref)
      rep_ref/rep2_ref: (bn, W) native dtype, W = G * D (lane-packed rows).
      c_ref:            (1, W) f32 center, lane-tiled G times.
      seg_ref:          (W, G) f32 0/1 segment matrix (only when packed).
      out_ref:          (bn, G) per-sample losses, or (1, 1, G) block partial sum.
    """
    if packed:
        rep_ref, rep2_ref, c_ref, seg_ref, out_ref = refs
    else:
        rep_ref, rep2_ref, c_ref, out_ref = refs

    c = c_ref[...]                                   # (1, W) f32
    x1 = rep_ref[...].astype(jnp.float32)            # in-kernel upcast
    x2 = rep2_ref[...].astype(jnp.float32)
    d1 = x1 - c                                      # bind the diff once
    d2 = x2 - c
    sq1 = d1 * d1
    sq2 = d2 * d2

    if packed:
        # Lane-packed layout: each VMEM row holds G original rows of D lanes.
        # Segmented lane reduction as a tiny 0/1 matmul on the MXU; seg is a
        # streamed constant input (index_map is constant -> fetched once).
        seg = seg_ref[...]                            # (W, G)
        dis1 = jnp.dot(sq1, seg, preferred_element_type=jnp.float32,
                       precision=jax.lax.Precision.HIGHEST)
        dis2 = jnp.dot(sq2, seg, preferred_element_type=jnp.float32,
                       precision=jax.lax.Precision.HIGHEST)
    else:
        # Plain lane reduction over the feature axis.
        dis1 = jnp.sum(sq1, axis=1, keepdims=True)    # (bn, 1)
        dis2 = jnp.sum(sq2, axis=1, keepdims=True)

    var = (dis1 - dis2) ** 2
    loss = 0.5 * jnp.exp(-var) * (dis1 + dis2) + 0.5 * var   # (bn, G)

    if not partial_sum:
        out_ref[...] = loss
    else:
        # Mask garbage rows of a ragged last block before the in-block sum
        # (per-sample outputs could rely on Pallas dropping OOB rows, but the
        # partial sum mixes rows so the tail must be masked explicitly).
        if total_rows % block_rows != 0:
            row = jax.lax.broadcasted_iota(jnp.int32, loss.shape, 0)
            valid = (pl.program_id(0) * block_rows + row) < total_rows
            loss = jnp.where(valid, loss, 0.0)
        out_ref[...] = jnp.sum(loss, axis=0, keepdims=True).reshape(
            1, 1, loss.shape[1])


def _vmem_cap_bytes():
    """Usable VMEM budget for this chip generation (~25% headroom)."""
    try:
        info = pltpu.get_tpu_info()
        phys = int(getattr(info, "vmem_capacity_bytes", 0) or 0)
        if phys > 0:
            return (phys * 3) // 4          # v7x: 48 MiB, v5e/v6e: 96 MiB
    except Exception:
        pass
    # Conservative fallback: fits v7x's 64 MiB/TC, above v6e's 32 MiB default.
    return 48 << 20


def dsvdd_unc_loss(rep, rep2, c, *, reduction='mean', block_rows=None):
    """Pallas TPU implementation of DSVDDUncLoss.forward.

    rep, rep2: [N, D]; c: [D].  reduction in {'mean', 'sum'} returns a scalar;
    any other value (e.g. None) returns the per-sample loss vector, like the
    PyTorch module.
    """
    N, D = rep.shape
    assert rep2.shape == (N, D), "rep and rep2 must have the same shape"
    assert c.shape == (D,), "c must be a (D,) vector"

    # Stream the inputs in their native dtype; upcast to f32 inside the kernel.
    if rep.dtype not in (jnp.float32, jnp.bfloat16, jnp.float16):
        rep = rep.astype(jnp.float32)
    if rep2.dtype != rep.dtype:
        rep2 = rep2.astype(rep.dtype)
    itemsize = jnp.dtype(rep.dtype).itemsize
    row_align = {4: 8, 2: 16, 1: 32}.get(itemsize, 8)

    # Lane-dense packing for small feature dims: (N, D) -> (N // G, G * D),
    # a free row-major reshape (G original rows share one 128-lane row).
    G = 1
    if D < 128 and 128 % D == 0 and N % (128 // D) == 0:
        G = 128 // D
    W = G * D
    R = N // G

    rep_p = rep.reshape(R, W)
    rep2_p = rep2.reshape(R, W)
    c_p = jnp.tile(c.astype(jnp.float32), (G,)).reshape(1, W)

    lanes_pad = ((W + 127) // 128) * 128

    # ---- tile sizing -------------------------------------------------------
    # Per-row VMEM cost: 2 inputs x 2 pipeline buffers (native dtype) plus
    # ~8 full-tile f32 temporaries inside the kernel body.
    per_row = 4 * lanes_pad * itemsize + 8 * lanes_pad * 4
    vmem_cap = _vmem_cap_bytes()
    max_rows_vmem = max(row_align, (vmem_cap - (4 << 20)) // per_row)

    if block_rows is None:
        # ~3 MiB per streamed input buffer.
        block_rows = (3 << 20) // (lanes_pad * itemsize)
    block_rows = min(int(block_rows), int(max_rows_vmem))

    total_in_bytes = R * lanes_pad * itemsize
    if block_rows >= R:
        if total_in_bytes >= (2 << 20) and R >= 2 * row_align:
            # Keep >= 2 blocks so the "parallel" axis can shard across the two
            # v7x TensorCores instead of collapsing to a single block.
            half = pl.cdiv(R, 2)
            block_rows = ((half + row_align - 1) // row_align) * row_align
        else:
            block_rows = R                    # single block == full array dims
    else:
        block_rows = max(row_align, block_rows - block_rows % row_align)
    grid = pl.cdiv(R, block_rows)

    needed = block_rows * per_row + (1 << 20)          # + small constants/out
    vmem_limit = int(min(vmem_cap, max(needed + (4 << 20), 16 << 20)))
    vmem_limit = max(vmem_limit, int(needed))          # never undercut need

    # ---- specs ---------------------------------------------------------------
    packed = G > 1
    partial = reduction in ('mean', 'sum')

    in_arrays = [rep_p, rep2_p, c_p]
    in_specs = [
        pl.BlockSpec((block_rows, W), lambda i: (i, 0)),   # rep
        pl.BlockSpec((block_rows, W), lambda i: (i, 0)),   # rep2
        pl.BlockSpec((1, W), lambda i: (0, 0)),            # center
    ]
    if packed:
        lane = jnp.arange(W, dtype=jnp.int32)[:, None]
        grp = jnp.arange(G, dtype=jnp.int32)[None, :]
        seg = (lane // D == grp).astype(jnp.float32)       # (W, G) 0/1 constant
        in_arrays.append(seg)
        in_specs.append(pl.BlockSpec((W, G), lambda i: (0, 0)))

    if partial:
        # One tiny partial-sum row per grid step: avoids writing / re-reading
        # the full per-sample vector for 'mean'/'sum' reductions.
        out_shape = jax.ShapeDtypeStruct((grid, 1, G), jnp.float32)
        out_spec = pl.BlockSpec((1, 1, G), lambda i: (i, 0, 0))
    else:
        # Note: for G == 1 this per-sample output is lane-sparse ((bn, 1)
        # blocks -> masked stores); a lane-dense repack would need an
        # in-kernel transpose and the win is modest (output << input traffic).
        out_shape = jax.ShapeDtypeStruct((R, G), jnp.float32)
        out_spec = pl.BlockSpec((block_rows, G), lambda i: (i, 0))

    kernel = functools.partial(_dsvdd_unc_kernel, packed=packed,
                               partial_sum=partial, block_rows=block_rows,
                               total_rows=R)
    out = pl.pallas_call(
        kernel,
        out_shape=out_shape,
        grid_spec=pltpu.PrefetchScalarGridSpec(
            num_scalar_prefetch=0,
            grid=(grid,),
            in_specs=in_specs,
            out_specs=out_spec,
        ),
        compiler_params=pltpu.CompilerParams(
            dimension_semantics=("parallel",),
            vmem_limit_bytes=vmem_limit,
        ),
    )(*in_arrays)

    if partial:
        total = jnp.sum(out)
        if reduction == 'mean':
            return total / N
        return total
    # Like the PyTorch module, any other reduction returns per-sample losses.
    return out.reshape(N)                   # packed (R, G) -> original order


def dsvdd_unc_loss_ref(rep, rep2, c, reduction='mean'):
    rep = rep.astype(jnp.float32)
    rep2 = rep2.astype(jnp.float32)
    c = c.astype(jnp.float32)
    dis1 = jnp.sum((rep - c) ** 2, axis=1)
    dis2 = jnp.sum((rep2 - c) ** 2, axis=1)
    var = (dis1 - dis2) ** 2
    loss = 0.5 * jnp.exp(-var) * (dis1 + dis2) + 0.5 * var
    if reduction == 'mean':
        return jnp.mean(loss)
    elif reduction == 'sum':
        return jnp.sum(loss)
    return loss


if __name__ == "__main__":
    key = jax.random.PRNGKey(0)
    k1, k2, k3 = jax.random.split(key, 3)

    def make_inputs(n, d, dtype):
        a = jax.random.normal(k1, (n, d), dtype=jnp.float32)
        b = a + 0.1 * jax.random.normal(k2, (n, d), dtype=jnp.float32)
        cc = jax.random.normal(k3, (d,), dtype=jnp.float32)
        return a.astype(dtype), b.astype(dtype), cc

    ok = True

    # 1) small packed case (batch=8, hidden=32), mean reduction (partial sums).
    rep, rep2, c = make_inputs(8, 32, jnp.float32)
    out = jax.block_until_ready(dsvdd_unc_loss(rep, rep2, c, reduction='mean'))
    ref = dsvdd_unc_loss_ref(rep, rep2, c, reduction='mean')
    ok &= bool(jnp.allclose(out, ref, rtol=1e-4, atol=1e-3))

    # 2) multi-block packed case with an explicit tile, sum reduction
    #    (exercises grid > 1 partial-sum blocks on the "parallel" axis).
    rep, rep2, c = make_inputs(64, 32, jnp.float32)
    out = jax.block_until_ready(
        dsvdd_unc_loss(rep, rep2, c, reduction='sum', block_rows=8))
    ref = dsvdd_unc_loss_ref(rep, rep2, c, reduction='sum')
    ok &= bool(jnp.allclose(out, ref, rtol=1e-4, atol=1e-2))

    # 3) bf16 inputs: streamed in bf16, upcast to f32 inside the kernel.
    rep, rep2, c = make_inputs(32, 16, jnp.bfloat16)
    out = jax.block_until_ready(dsvdd_unc_loss(rep, rep2, c, reduction='mean'))
    ref = dsvdd_unc_loss_ref(rep, rep2, c, reduction='mean')
    ok &= bool(jnp.allclose(out, ref, rtol=1e-4, atol=1e-3))

    # 4) unpacked feature dim (128 % D != 0), per-sample loss vector.
    rep, rep2, c = make_inputs(16, 40, jnp.float32)
    out = jax.block_until_ready(dsvdd_unc_loss(rep, rep2, c, reduction=None))
    ref = dsvdd_unc_loss_ref(rep, rep2, c, reduction=None)
    ok &= bool(jnp.allclose(out, ref, rtol=1e-4, atol=1e-4))

    # 5) ragged last block (R=10, block=8): exercises the in-kernel tail mask
    #    on the partial-sum path.
    rep, rep2, c = make_inputs(40, 32, jnp.float32)
    out = jax.block_until_ready(
        dsvdd_unc_loss(rep, rep2, c, reduction='sum', block_rows=8))
    ref = dsvdd_unc_loss_ref(rep, rep2, c, reduction='sum')
    ok &= bool(jnp.allclose(out, ref, rtol=1e-4, atol=1e-2))

    assert ok, "Pallas DSVDDUncLoss does not match the reference"
    print("KERNEL_OK")
</pallas_src>

<mosaic_0001>
module attributes {stable_mosaic.version = 11 : i64} {
  func.func @_dsvdd_unc_kernel(%arg0: i32, %arg1: memref<2x128xf32, #tpu.memory_space<vmem>>, %arg2: memref<2x128xf32, #tpu.memory_space<vmem>>, %arg3: memref<1x128xf32, #tpu.memory_space<vmem>>, %arg4: memref<128x4xf32, #tpu.memory_space<vmem>>, %arg5: memref<1x1x4xf32, #tpu.memory_space<vmem>>) attributes {dimension_semantics = [#tpu.dimension_semantics<parallel>], iteration_bounds = array<i64: 1>, scalar_prefetch = 0 : i64, scratch_operands = 0 : i64, tpu.core_type = #tpu.core_type<tc>, window_params = [{transform_indices = @transform_0, window_bounds = array<i64: 2, 128>}, {transform_indices = @transform_1, window_bounds = array<i64: 2, 128>}, {pipeline_mode = #tpu.pipeline_mode<synchronous>, transform_indices = @transform_2, window_bounds = array<i64: 1, 128>}, {pipeline_mode = #tpu.pipeline_mode<synchronous>, transform_indices = @transform_3, window_bounds = array<i64: 128, 4>}, {transform_indices = @transform_4, window_bounds = array<i64: 1, 1, 4>}]} {
    %c0 = arith.constant 0 : index
    %c0_0 = arith.constant 0 : index
    %0 = vector.load %arg3[%c0, %c0_0] : memref<1x128xf32, #tpu.memory_space<vmem>>, vector<1x128xf32>
    %c0_1 = arith.constant 0 : index
    %c0_2 = arith.constant 0 : index
    %1 = vector.load %arg1[%c0_1, %c0_2] : memref<2x128xf32, #tpu.memory_space<vmem>>, vector<2x128xf32>
    %c0_3 = arith.constant 0 : index
    %c0_4 = arith.constant 0 : index
    %2 = vector.load %arg2[%c0_3, %c0_4] : memref<2x128xf32, #tpu.memory_space<vmem>>, vector<2x128xf32>
    %3 = vector.broadcast %0 : vector<1x128xf32> to vector<2x128xf32>
    %4 = arith.subf %1, %3 : vector<2x128xf32>
    %5 = vector.broadcast %0 : vector<1x128xf32> to vector<2x128xf32>
    %6 = arith.subf %2, %5 : vector<2x128xf32>
    %7 = arith.mulf %4, %4 : vector<2x128xf32>
    %8 = arith.mulf %6, %6 : vector<2x128xf32>
    %c0_5 = arith.constant 0 : index
    %c0_6 = arith.constant 0 : index
    %9 = vector.load %arg4[%c0_5, %c0_6] : memref<128x4xf32, #tpu.memory_space<vmem>>, vector<128x4xf32>
    %cst = arith.constant dense<0.000000e+00> : vector<2x4xf32>
    %10 = tpu.matmul %7, %9, %cst {dimension_numbers = #tpu.dot_dimension_numbers<[1], [0], [0], [1], [0, 0, 1, 1], [], []>, precision = #tpu.contract_precision<fp32>} : vector<2x128xf32>, vector<128x4xf32>, vector<2x4xf32> -> vector<2x4xf32>
    %cst_7 = arith.constant dense<0.000000e+00> : vector<2x4xf32>
    %11 = tpu.matmul %8, %9, %cst_7 {dimension_numbers = #tpu.dot_dimension_numbers<[1], [0], [0], [1], [0, 0, 1, 1], [], []>, precision = #tpu.contract_precision<fp32>} : vector<2x128xf32>, vector<128x4xf32>, vector<2x4xf32> -> vector<2x4xf32>
    %12 = arith.subf %10, %11 : vector<2x4xf32>
    %13 = arith.mulf %12, %12 : vector<2x4xf32>
    %cst_8 = arith.constant 0.000000e+00 : f32
    %14 = vector.broadcast %cst_8 : f32 to vector<2x4xf32>
    %15 = arith.subf %14, %13 : vector<2x4xf32>
    %16 = math.exp %15 : vector<2x4xf32>
    %cst_9 = arith.constant 5.000000e-01 : f32
    %17 = vector.broadcast %cst_9 : f32 to vector<2x4xf32>
    %18 = arith.mulf %17, %16 : vector<2x4xf32>
    %19 = arith.addf %10, %11 : vector<2x4xf32>
    %20 = arith.mulf %18, %19 : vector<2x4xf32>
    %cst_10 = arith.constant 5.000000e-01 : f32
    %21 = vector.broadcast %cst_10 : f32 to vector<2x4xf32>
    %22 = arith.mulf %21, %13 : vector<2x4xf32>
    %23 = arith.addf %20, %22 : vector<2x4xf32>
    %cst_11 = arith.constant dense<0.000000e+00> : vector<4xf32>
    %24 = vector.multi_reduction <add>, %23, %cst_11 [0] : vector<2x4xf32> to vector<4xf32>
    %25 = vector.shape_cast %24 : vector<4xf32> to vector<1x4xf32>
    %26 = vector.shape_cast %25 : vector<1x4xf32> to vector<1x1x4xf32>
    %c0_12 = arith.constant 0 : index
    %c0_13 = arith.constant 0 : index
    %c0_14 = arith.constant 0 : index
    %27 = vector.load %arg5[%c0_12, %c0_13, %c0_14] : memref<1x1x4xf32, #tpu.memory_space<vmem>>, vector<1x1x4xf32>
    tpu.vector_store %arg5[%c0_12, %c0_13, %c0_14], %26 {strides = array<i32>} : memref<1x1x4xf32, #tpu.memory_space<vmem>>, vector<1x1x4xf32>,
    return
  }
  func.func @transform_0(%arg0: i32) -> (i32, i32) {
    %c0_i32 = arith.constant 0 : i32
    %c0_i32_0 = arith.constant 0 : i32
    return %arg0, %c0_i32 : i32, i32
  }
  func.func @transform_1(%arg0: i32) -> (i32, i32) {
    %c0_i32 = arith.constant 0 : i32
    %c0_i32_0 = arith.constant 0 : i32
    return %arg0, %c0_i32 : i32, i32
  }
  func.func @transform_2(%arg0: i32) -> (i32, i32) {
    %c0_i32 = arith.constant 0 : i32
    %c0_i32_0 = arith.constant 0 : i32
    %c0_i32_1 = arith.constant 0 : i32
    return %c0_i32, %c0_i32_0 : i32, i32
  }
  func.func @transform_3(%arg0: i32) -> (i32, i32) {
    %c0_i32 = arith.constant 0 : i32
    %c0_i32_0 = arith.constant 0 : i32
    %c0_i32_1 = arith.constant 0 : i32
    return %c0_i32, %c0_i32_0 : i32, i32
  }
  func.func @transform_4(%arg0: i32) -> (i32, i32, i32) {
    %c0_i32 = arith.constant 0 : i32
    %c0_i32_0 = arith.constant 0 : i32
    %c0_i32_1 = arith.constant 0 : i32
    return %arg0, %c0_i32, %c0_i32_0 : i32, i32, i32
  }
}

</mosaic_0001>

<llo_original>
// kernel: tpu_custom_call.1
$region0: #{tpu_custom_call.1}
  #allocation0 [shape = 'u32[]', space=smem, size = 0x4, offset = 0x4, fixed_abs, tag = 'smem constant byte address 0x4 - core index']
  #allocation1 [shape = 'u32[144,128]{1,0:T(1,128)}', space=vmem, size = 0x12000, scoped, tag = 'internal scratch']
  %s0 = inlined_call_operand.vmem [shape: f32[2,128], index: 0, kind: input, shape index: {}]
  %s1 = inlined_call_operand.vmem [shape: f32[2,128], index: 1, kind: input, shape index: {}]
  %s2 = inlined_call_operand.vmem [shape: f32[1,128], index: 2, kind: input, shape index: {}]
  %s3 = inlined_call_operand.vmem [shape: f32[128,4], index: 3, kind: input, shape index: {}]
  %s4 = inlined_call_operand.hbm [shape: f32[1,1,4], index: 4, kind: output, shape index: {}]
  %s5 = sld [smem:[#allocation0]]
  $region26: #{tpu_custom_call.1} parent=0
    _
  %s7 = ssub.s32 1, %s5
  %s8 = scalar_select 0, %s7, %s5
  $region1: #{tpu_custom_call.1} parent=0
    #allocation2 [shape = 'u8[512]{0}', space=vmem, size = 0x400, scoped, tag = 'output window, operand 0, single buffered']
    #allocation3 [shape = 's32[1]{0}', space=sflag, size = 0x4, scoped, tag = 'scoped memory for tpu_custom_call.1']
    %9 = vsyncpa [#allocation3], 0
    // Predicated region
    $region2: #{tpu_custom_call.1} parent=1 // pred_check
      _
    $region3: #{tpu_custom_call.1} parent=1 // pred_check_branch
      %11 = sbr.rel (0) target = $region5
    $region4: #{tpu_custom_call.1} parent=1 // pred_region
      _
    $region5: #{tpu_custom_call.1} parent=1 // pred_fallthru
      _
    // Predicated region
    $region6: #{tpu_custom_call.1} parent=1 // pred_check
      _
    $region7: #{tpu_custom_call.1} parent=1 // pred_check_branch
      %13 = sbr.rel (0) target = $region9
    $region8: #{tpu_custom_call.1} parent=1 // pred_region
      _
    $region9: #{tpu_custom_call.1} parent=1 // pred_fallthru
      _
    // Predicated region
    $region10: #{tpu_custom_call.1} parent=1 // pred_check
      _
    $region11: #{tpu_custom_call.1} parent=1 // pred_check_branch
      %15 = sbr.rel (0) target = $region13
    $region12: #{tpu_custom_call.1} parent=1 // pred_region
      _
    $region13: #{tpu_custom_call.1} parent=1 // pred_fallthru
      _
    // Predicated region
    $region14: #{tpu_custom_call.1} parent=1 // pred_check
      _
    $region15: #{tpu_custom_call.1} parent=1 // pred_check_branch
      %17 = sbr.rel (0) target = $region17
    $region16: #{tpu_custom_call.1} parent=1 // pred_region
      _
    $region17: #{tpu_custom_call.1} parent=1 // pred_fallthru
      _
    %v18 = vld [vmem:[%s2] sm:$0x1]
    %v19 = vld [vmem:[%s0] sm:$0x3]
    %v20 = vld [vmem:[%s1] sm:$0x3]
    %v22 = vlaneseq
    %v23 = vshrl.u32 %v22, 7
    %v24 = vsub.s32 0, %v23
    %v25 = vrot.slane %v18, %v24
    %v27 = vsub.f32 %v19, %v25
    %v28 = vsub.f32 %v20, %v25
    %v29 = vmul.f32 %v27, %v27
    %v30 = vmul.f32 %v28, %v28
    %v31 = vld [vmem:[%s3] sm:$0xff]
    %v32 = vld [vmem:[%s3 + $0x8] sm:$0xff]
    %v33 = vld [vmem:[%s3 + $0x10] sm:$0xff]
    %v34 = vld [vmem:[%s3 + $0x18] sm:$0xff]
    %v35 = vld [vmem:[%s3 + $0x20] sm:$0xff]
    %v36 = vld [vmem:[%s3 + $0x28] sm:$0xff]
    %v37 = vld [vmem:[%s3 + $0x30] sm:$0xff]
    %v38 = vld [vmem:[%s3 + $0x38] sm:$0xff]
    %v39 = vld [vmem:[%s3 + $0x40] sm:$0xff]
    %v40 = vld [vmem:[%s3 + $0x48] sm:$0xff]
    %v41 = vld [vmem:[%s3 + $0x50] sm:$0xff]
    %v42 = vld [vmem:[%s3 + $0x58] sm:$0xff]
    %v43 = vld [vmem:[%s3 + $0x60] sm:$0xff]
    %v44 = vld [vmem:[%s3 + $0x68] sm:$0xff]
    %v45 = vld [vmem:[%s3 + $0x70] sm:$0xff]
    %v46 = vld [vmem:[%s3 + $0x78] sm:$0xff]
    %47 = vmatprep.subr.mxu0 0.0
    %v48 = vand.u32 %v46, 4294901760
    %49 = vmatpush1.msra.mxu0 %v48
    %50 = vmatprep.subr.mxu0 0.0
    %v51 = vand.u32 %v45, 4294901760
    %52 = vmatpush1.msra.mxu0 %v51
    %53 = vmatprep.subr.mxu0 0.0
    %v54 = vand.u32 %v44, 4294901760
    %55 = vmatpush1.msra.mxu0 %v54
    %56 = vmatprep.subr.mxu0 0.0
    %v57 = vand.u32 %v43, 4294901760
    %58 = vmatpush1.msra.mxu0 %v57
    %59 = vmatprep.subr.mxu0 0.0
    %v60 = vand.u32 %v42, 4294901760
    %61 = vmatpush1.msra.mxu0 %v60
    %62 = vmatprep.subr.mxu0 0.0
    %v63 = vand.u32 %v41, 4294901760
    %64 = vmatpush1.msra.mxu0 %v63
    %65 = vmatprep.subr.mxu0 0.0
    %v66 = vand.u32 %v40, 4294901760
    %67 = vmatpush1.msra.mxu0 %v66
    %68 = vmatprep.subr.mxu0 0.0
    %v69 = vand.u32 %v39, 4294901760
    %70 = vmatpush1.msra.mxu0 %v69
    %71 = vmatprep.subr.mxu0 0.0
    %v72 = vand.u32 %v38, 4294901760
    %73 = vmatpush1.msra.mxu0 %v72
    %74 = vmatprep.subr.mxu0 0.0
    %v75 = vand.u32 %v37, 4294901760
    %76 = vmatpush1.msra.mxu0 %v75
    %77 = vmatprep.subr.mxu0 0.0
    %v78 = vand.u32 %v36, 4294901760
    %79 = vmatpush1.msra.mxu0 %v78
    %80 = vmatprep.subr.mxu0 0.0
    %v81 = vand.u32 %v35, 4294901760
    %82 = vmatpush1.msra.mxu0 %v81
    %83 = vmatprep.subr.mxu0 0.0
    %v84 = vand.u32 %v34, 4294901760
    %85 = vmatpush1.msra.mxu0 %v84
    %86 = vmatprep.subr.mxu0 0.0
    %v87 = vand.u32 %v33, 4294901760
    %88 = vmatpush1.msra.mxu0 %v87
    %89 = vmatprep.subr.mxu0 0.0
    %v90 = vand.u32 %v32, 4294901760
    %91 = vmatpush1.msra.mxu0 %v90
    %92 = vmatprep.subr.mxu0 0.0
    %v93 = vand.u32 %v31, 4294901760
    %94 = vmatpush1.msra.mxu0 %v93
    %95 = vmatprep.subr.mxu0 0.0
    %96 = vmatpush2.msra.mxu0 0.0
    %97 = vmatprep.subr.mxu0 0.0
    %98 = vmatpush2.msra.mxu0 0.0
    %99 = vmatprep.subr.mxu0 0.0
    %100 = vmatpush2.msra.mxu0 0.0
    %101 = vmatprep.subr.mxu0 0.0
    %102 = vmatpush2.msra.mxu0 0.0
    %103 = vmatprep.subr.mxu0 0.0
    %104 = vmatpush2.msra.mxu0 0.0
    %105 = vmatprep.subr.mxu0 0.0
    %106 = vmatpush2.msra.mxu0 0.0
    %107 = vmatprep.subr.mxu0 0.0
    %108 = vmatpush2.msra.mxu0 0.0
    %109 = vmatprep.subr.mxu0 0.0
    %110 = vmatpush2.msra.mxu0 0.0
    %111 = vmatprep.subr.mxu0 0.0
    %112 = vmatpush2.msra.mxu0 0.0
    %113 = vmatprep.subr.mxu0 0.0
    %114 = vmatpush2.msra.mxu0 0.0
    %115 = vmatprep.subr.mxu0 0.0
    %116 = vmatpush2.msra.mxu0 0.0
    %117 = vmatprep.subr.mxu0 0.0
    %118 = vmatpush2.msra.mxu0 0.0
    %119 = vmatprep.subr.mxu0 0.0
    %120 = vmatpush2.msra.mxu0 0.0
    %121 = vmatprep.subr.mxu0 0.0
    %122 = vmatpush2.msra.mxu0 0.0
    %123 = vmatprep.subr.mxu0 0.0
    %124 = vmatpush2.msra.mxu0 0.0
    %125 = vmatprep.subr.mxu0 0.0
    %126 = vmatpush2.msra.mxu0 0.0
    %127 = vmatprep.mubr.f32.mxu0 0.0
    %v128 = vand.u32 %v29, 4294901760
    %v129 = vsub.f32 %v29, %v128
    %v130 = vand.u32 %v129, 4294901760
    %v131 = vsub.f32 %v129, %v130
    %v132 = vand.u32 %v131, 4294901760
    %133 = vmatmul.mubr.f32.gmra.mxu0 %v132
    %v134 = vpop.f32.mrf.mxu0
    %v135 = vadd.f32 0.0, %v134
    %v136 = vpop.f32.mrf.mxu0
    %137 = vdwg.mxu0
    %138 = vmatprep.subr.mxu0 0.0
    %v139 = vand.u32 %v46, 4294901760
    %v140 = vsub.f32 %v46, %v139
    %v141 = vand.u32 %v140, 4294901760
    %v142 = vsub.f32 %v140, %v141
    %v143 = vand.u32 %v142, 4294901760
    %144 = vmatpush1.msra.mxu0 %v143
    %145 = vmatprep.subr.mxu0 0.0
    %v146 = vand.u32 %v45, 4294901760
    %v147 = vsub.f32 %v45, %v146
    %v148 = vand.u32 %v147, 4294901760
    %v149 = vsub.f32 %v147, %v148
    %v150 = vand.u32 %v149, 4294901760
    %151 = vmatpush1.msra.mxu0 %v150
    %152 = vmatprep.subr.mxu0 0.0
    %v153 = vand.u32 %v44, 4294901760
    %v154 = vsub.f32 %v44, %v153
    %v155 = vand.u32 %v154, 4294901760
    %v156 = vsub.f32 %v154, %v155
    %v157 = vand.u32 %v156, 4294901760
    %158 = vmatpush1.msra.mxu0 %v157
    %159 = vmatprep.subr.mxu0 0.0
    %v160 = vand.u32 %v43, 4294901760
    %v161 = vsub.f32 %v43, %v160
    %v162 = vand.u32 %v161, 4294901760
    %v163 = vsub.f32 %v161, %v162
    %v164 = vand.u32 %v163, 4294901760
    %165 = vmatpush1.msra.mxu0 %v164
    %166 = vmatprep.subr.mxu0 0.0
    %v167 = vand.u32 %v42, 4294901760
    %v168 = vsub.f32 %v42, %v167
    %v169 = vand.u32 %v168, 4294901760
    %v170 = vsub.f32 %v168, %v169
    %v171 = vand.u32 %v170, 4294901760
    %172 = vmatpush1.msra.mxu0 %v171
    %173 = vmatprep.subr.mxu0 0.0
    %v174 = vand.u32 %v41, 4294901760
    %v175 = vsub.f32 %v41, %v174
    %v176 = vand.u32 %v175, 4294901760
    %v177 = vsub.f32 %v175, %v176
    %v178 = vand.u32 %v177, 4294901760
    %179 = vmatpush1.msra.mxu0 %v178
    %180 = vmatprep.subr.mxu0 0.0
    %v181 = vand.u32 %v40, 4294901760
    %v182 = vsub.f32 %v40, %v181
    %v183 = vand.u32 %v182, 4294901760
    %v184 = vsub.f32 %v182, %v183
    %v185 = vand.u32 %v184, 4294901760
    %186 = vmatpush1.msra.mxu0 %v185
    %187 = vmatprep.subr.mxu0 0.0
    %v188 = vand.u32 %v39, 4294901760
    %v189 = vsub.f32 %v39, %v188
    %v190 = vand.u32 %v189, 4294901760
    %v191 = vsub.f32 %v189, %v190
    %v192 = vand.u32 %v191, 4294901760
    %193 = vmatpush1.msra.mxu0 %v192
    %194 = vmatprep.subr.mxu0 0.0
    %v195 = vand.u32 %v38, 4294901760
    %v196 = vsub.f32 %v38, %v195
    %v197 = vand.u32 %v196, 4294901760
    %v198 = vsub.f32 %v196, %v197
    %v199 = vand.u32 %v198, 4294901760
    %200 = vmatpush1.msra.mxu0 %v199
    %201 = vmatprep.subr.mxu0 0.0
    %v202 = vand.u32 %v37, 4294901760
    %v203 = vsub.f32 %v37, %v202
    %v204 = vand.u32 %v203, 4294901760
    %v205 = vsub.f32 %v203, %v204
    %v206 = vand.u32 %v205, 4294901760
    %207 = vmatpush1.msra.mxu0 %v206
    %208 = vmatprep.subr.mxu0 0.0
    %v209 = vand.u32 %v36, 4294901760
    %v210 = vsub.f32 %v36, %v209
    %v211 = vand.u32 %v210, 4294901760
    %v212 = vsub.f32 %v210, %v211
    %v213 = vand.u32 %v212, 4294901760
    %214 = vmatpush1.msra.mxu0 %v213
    %215 = vmatprep.subr.mxu0 0.0
    %v216 = vand.u32 %v35, 4294901760
    %v217 = vsub.f32 %v35, %v216
    %v218 = vand.u32 %v217, 4294901760
    %v219 = vsub.f32 %v217, %v218
    %v220 = vand.u32 %v219, 4294901760
    %221 = vmatpush1.msra.mxu0 %v220
    %222 = vmatprep.subr.mxu0 0.0
    %v223 = vand.u32 %v34, 4294901760
    %v224 = vsub.f32 %v34, %v223
    %v225 = vand.u32 %v224, 4294901760
    %v226 = vsub.f32 %v224, %v225
    %v227 = vand.u32 %v226, 4294901760
    %228 = vmatpush1.msra.mxu0 %v227
    %229 = vmatprep.subr.mxu0 0.0
    %v230 = vand.u32 %v33, 4294901760
    %v231 = vsub.f32 %v33, %v230
    %v232 = vand.u32 %v231, 4294901760
    %v233 = vsub.f32 %v231, %v232
    %v234 = vand.u32 %v233, 4294901760
    %235 = vmatpush1.msra.mxu0 %v234
    %236 = vmatprep.subr.mxu0 0.0
    %v237 = vand.u32 %v32, 4294901760
    %v238 = vsub.f32 %v32, %v237
    %v239 = vand.u32 %v238, 4294901760
    %v240 = vsub.f32 %v238, %v239
    %v241 = vand.u32 %v240, 4294901760
    %242 = vmatpush1.msra.mxu0 %v241
    %243 = vmatprep.subr.mxu0 0.0
    %v244 = vand.u32 %v31, 4294901760
    %v245 = vsub.f32 %v31, %v244
    %v246 = vand.u32 %v245, 4294901760
    %v247 = vsub.f32 %v245, %v246
    %v248 = vand.u32 %v247, 4294901760
    %249 = vmatpush1.msra.mxu0 %v248
    %250 = vmatprep.subr.mxu0 0.0
    %251 = vmatpush2.msra.mxu0 0.0
    %252 = vmatprep.subr.mxu0 0.0
    %253 = vmatpush2.msra.mxu0 0.0
    %254 = vmatprep.subr.mxu0 0.0
    %255 = vmatpush2.msra.mxu0 0.0
    %256 = vmatprep.subr.mxu0 0.0
    %257 = vmatpush2.msra.mxu0 0.0
    %258 = vmatprep.subr.mxu0 0.0
    %259 = vmatpush2.msra.mxu0 0.0
    %260 = vmatprep.subr.mxu0 0.0
    %261 = vmatpush2.msra.mxu0 0.0
    %262 = vmatprep.subr.mxu0 0.0
    %263 = vmatpush2.msra.mxu0 0.0
    %264 = vmatprep.subr.mxu0 0.0
    %265 = vmatpush2.msra.mxu0 0.0
    %266 = vmatprep.subr.mxu0 0.0
    %267 = vmatpush2.msra.mxu0 0.0
    %268 = vmatprep.subr.mxu0 0.0
    %269 = vmatpush2.msra.mxu0 0.0
    %270 = vmatprep.subr.mxu0 0.0
    %271 = vmatpush2.msra.mxu0 0.0
    %272 = vmatprep.subr.mxu0 0.0
    %273 = vmatpush2.msra.mxu0 0.0
    %274 = vmatprep.subr.mxu0 0.0
    %275 = vmatpush2.msra.mxu0 0.0
    %276 = vmatprep.subr.mxu0 0.0
    %277 = vmatpush2.msra.mxu0 0.0
    %278 = vmatprep.subr.mxu0 0.0
    %279 = vmatpush2.msra.mxu0 0.0
    %280 = vmatprep.subr.mxu0 0.0
    %281 = vmatpush2.msra.mxu0 0.0
    %282 = vmatprep.mubr.f32.mxu0 0.0
    %v283 = vand.u32 %v29, 4294901760
    %284 = vmatmul.mubr.f32.gmra.mxu0 %v283
    %v285 = vpop.f32.mrf.mxu0
    %v286 = vadd.f32 %v135, %v285
    %v287 = vpop.f32.mrf.mxu0
    %288 = vdwg.mxu0
    %289 = vmatprep.subr.mxu0 0.0
    %v290 = vand.u32 %v46, 4294901760
    %v291 = vsub.f32 %v46, %v290
    %292 = vmatpush1.msra.mxu0 %v291
    %293 = vmatprep.subr.mxu0 0.0
    %v294 = vand.u32 %v45, 4294901760
    %v295 = vsub.f32 %v45, %v294
    %296 = vmatpush1.msra.mxu0 %v295
    %297 = vmatprep.subr.mxu0 0.0
    %v298 = vand.u32 %v44, 4294901760
    %v299 = vsub.f32 %v44, %v298
    %300 = vmatpush1.msra.mxu0 %v299
    %301 = vmatprep.subr.mxu0 0.0
    %v302 = vand.u32 %v43, 4294901760
    %v303 = vsub.f32 %v43, %v302
    %304 = vmatpush1.msra.mxu0 %v303
    %305 = vmatprep.subr.mxu0 0.0
    %v306 = vand.u32 %v42, 4294901760
    %v307 = vsub.f32 %v42, %v306
    %308 = vmatpush1.msra.mxu0 %v307
    %309 = vmatprep.subr.mxu0 0.0
    %v310 = vand.u32 %v41, 4294901760
    %v311 = vsub.f32 %v41, %v310
    %312 = vmatpush1.msra.mxu0 %v311
    %313 = vmatprep.subr.mxu0 0.0
    %v314 = vand.u32 %v40, 4294901760
    %v315 = vsub.f32 %v40, %v314
    %316 = vmatpush1.msra.mxu0 %v315
    %317 = vmatprep.subr.mxu0 0.0
    %v318 = vand.u32 %v39, 4294901760
    %v319 = vsub.f32 %v39, %v318
    %320 = vmatpush1.msra.mxu0 %v319
    %321 = vmatprep.subr.mxu0 0.0
    %v322 = vand.u32 %v38, 4294901760
    %v323 = vsub.f32 %v38, %v322
    %324 = vmatpush1.msra.mxu0 %v323
    %325 = vmatprep.subr.mxu0 0.0
    %v326 = vand.u32 %v37, 4294901760
    %v327 = vsub.f32 %v37, %v326
    %328 = vmatpush1.msra.mxu0 %v327
    %329 = vmatprep.subr.mxu0 0.0
    %v330 = vand.u32 %v36, 4294901760
    %v331 = vsub.f32 %v36, %v330
    %332 = vmatpush1.msra.mxu0 %v331
    %333 = vmatprep.subr.mxu0 0.0
    %v334 = vand.u32 %v35, 4294901760
    %v335 = vsub.f32 %v35, %v334
    %336 = vmatpush1.msra.mxu0 %v335
    %337 = vmatprep.subr.mxu0 0.0
    %v338 = vand.u32 %v34, 4294901760
    %v339 = vsub.f32 %v34, %v338
    %340 = vmatpush1.msra.mxu0 %v339
    %341 = vmatprep.subr.mxu0 0.0
    %v342 = vand.u32 %v33, 4294901760
    %v343 = vsub.f32 %v33, %v342
    %344 = vmatpush1.msra.mxu0 %v343
    %345 = vmatprep.subr.mxu0 0.0
    %v346 = vand.u32 %v32, 4294901760
    %v347 = vsub.f32 %v32, %v346
    %348 = vmatpush1.msra.mxu0 %v347
    %349 = vmatprep.subr.mxu0 0.0
    %v350 = vand.u32 %v31, 4294901760
    %v351 = vsub.f32 %v31, %v350
    %352 = vmatpush1.msra.mxu0 %v351
    %353 = vmatprep.subr.mxu0 0.0
    %354 = vmatpush2.msra.mxu0 0.0
    %355 = vmatprep.subr.mxu0 0.0
    %356 = vmatpush2.msra.mxu0 0.0
    %357 = vmatprep.subr.mxu0 0.0
    %358 = vmatpush2.msra.mxu0 0.0
    %359 = vmatprep.subr.mxu0 0.0
    %360 = vmatpush2.msra.mxu0 0.0
    %361 = vmatprep.subr.mxu0 0.0
    %362 = vmatpush2.msra.mxu0 0.0
    %363 = vmatprep.subr.mxu0 0.0
    %364 = vmatpush2.msra.mxu0 0.0
    %365 = vmatprep.subr.mxu0 0.0
    %366 = vmatpush2.msra.mxu0 0.0
    %367 = vmatprep.subr.mxu0 0.0
    %368 = vmatpush2.msra.mxu0 0.0
    %369 = vmatprep.subr.mxu0 0.0
    %370 = vmatpush2.msra.mxu0 0.0
    %371 = vmatprep.subr.mxu0 0.0
    %372 = vmatpush2.msra.mxu0 0.0
    %373 = vmatprep.subr.mxu0 0.0
    %374 = vmatpush2.msra.mxu0 0.0
    %375 = vmatprep.subr.mxu0 0.0
    %376 = vmatpush2.msra.mxu0 0.0
    %377 = vmatprep.subr.mxu0 0.0
    %378 = vmatpush2.msra.mxu0 0.0
    %379 = vmatprep.subr.mxu0 0.0
    %380 = vmatpush2.msra.mxu0 0.0
    %381 = vmatprep.subr.mxu0 0.0
    %382 = vmatpush2.msra.mxu0 0.0
    %383 = vmatprep.subr.mxu0 0.0
    %384 = vmatpush2.msra.mxu0 0.0
    %385 = vmatprep.mubr.f32.mxu0 0.0
    %v386 = vand.u32 %v29, 4294901760
    %v387 = vsub.f32 %v29, %v386
    %388 = vmatmul.mubr.f32.gmra.mxu0 %v387
    %v389 = vpop.f32.mrf.mxu0
    %v390 = vadd.f32 %v286, %v389
    %v391 = vpop.f32.mrf.mxu0
    %392 = vdwg.mxu0
    %393 = vmatprep.subr.mxu0 0.0
    %v394 = vand.u32 %v46, 4294901760
    %395 = vmatpush1.msra.mxu0 %v394
    %396 = vmatprep.subr.mxu0 0.0
    %v397 = vand.u32 %v45, 4294901760
    %398 = vmatpush1.msra.mxu0 %v397
    %399 = vmatprep.subr.mxu0 0.0
    %v400 = vand.u32 %v44, 4294901760
    %401 = vmatpush1.msra.mxu0 %v400
    %402 = vmatprep.subr.mxu0 0.0
    %v403 = vand.u32 %v43, 4294901760
    %404 = vmatpush1.msra.mxu0 %v403
    %405 = vmatprep.subr.mxu0 0.0
    %v406 = vand.u32 %v42, 4294901760
    %407 = vmatpush1.msra.mxu0 %v406
    %408 = vmatprep.subr.mxu0 0.0
    %v409 = vand.u32 %v41, 4294901760
    %410 = vmatpush1.msra.mxu0 %v409
    %411 = vmatprep.subr.mxu0 0.0
    %v412 = vand.u32 %v40, 4294901760
    %413 = vmatpush1.msra.mxu0 %v412
    %414 = vmatprep.subr.mxu0 0.0
    %v415 = vand.u32 %v39, 4294901760
    %416 = vmatpush1.msra.mxu0 %v415
    %417 = vmatprep.subr.mxu0 0.0
    %v418 = vand.u32 %v38, 4294901760
    %419 = vmatpush1.msra.mxu0 %v418
    %420 = vmatprep.subr.mxu0 0.0
    %v421 = vand.u32 %v37, 4294901760
    %422 = vmatpush1.msra.mxu0 %v421
    %423 = vmatprep.subr.mxu0 0.0
    %v424 = vand.u32 %v36, 4294901760
    %425 = vmatpush1.msra.mxu0 %v424
    %426 = vmatprep.subr.mxu0 0.0
    %v427 = vand.u32 %v35, 4294901760
    %428 = vmatpush1.msra.mxu0 %v427
    %429 = vmatprep.subr.mxu0 0.0
    %v430 = vand.u32 %v34, 4294901760
    %431 = vmatpush1.msra.mxu0 %v430
    %432 = vmatprep.subr.mxu0 0.0
    %v433 = vand.u32 %v33, 4294901760
    %434 = vmatpush1.msra.mxu0 %v433
    %435 = vmatprep.subr.mxu0 0.0
    %v436 = vand.u32 %v32, 4294901760
    %437 = vmatpush1.msra.mxu0 %v436
    %438 = vmatprep.subr.mxu0 0.0
    %v439 = vand.u32 %v31, 4294901760
    %440 = vmatpush1.msra.mxu0 %v439
    %441 = vmatprep.subr.mxu0 0.0
    %442 = vmatpush2.msra.mxu0 0.0
    %443 = vmatprep.subr.mxu0 0.0
    %444 = vmatpush2.msra.mxu0 0.0
    %445 = vmatprep.subr.mxu0 0.0
    %446 = vmatpush2.msra.mxu0 0.0
    %447 = vmatprep.subr.mxu0 0.0
    %448 = vmatpush2.msra.mxu0 0.0
    %449 = vmatprep.subr.mxu0 0.0
    %450 = vmatpush2.msra.mxu0 0.0
    %451 = vmatprep.subr.mxu0 0.0
    %452 = vmatpush2.msra.mxu0 0.0
    %453 = vmatprep.subr.mxu0 0.0
    %454 = vmatpush2.msra.mxu0 0.0
    %455 = vmatprep.subr.mxu0 0.0
    %456 = vmatpush2.msra.mxu0 0.0
    %457 = vmatprep.subr.mxu0 0.0
    %458 = vmatpush2.msra.mxu0 0.0
    %459 = vmatprep.subr.mxu0 0.0
    %460 = vmatpush2.msra.mxu0 0.0
    %461 = vmatprep.subr.mxu0 0.0
    %462 = vmatpush2.msra.mxu0 0.0
    %463 = vmatprep.subr.mxu0 0.0
    %464 = vmatpush2.msra.mxu0 0.0
    %465 = vmatprep.subr.mxu0 0.0
    %466 = vmatpush2.msra.mxu0 0.0
    %467 = vmatprep.subr.mxu0 0.0
    %468 = vmatpush2.msra.mxu0 0.0
    %469 = vmatprep.subr.mxu0 0.0
    %470 = vmatpush2.msra.mxu0 0.0
    %471 = vmatprep.subr.mxu0 0.0
    %472 = vmatpush2.msra.mxu0 0.0
    %473 = vmatprep.mubr.f32.mxu0 0.0
    %v474 = vand.u32 %v29, 4294901760
    %v475 = vsub.f32 %v29, %v474
    %v476 = vand.u32 %v475, 4294901760
    %477 = vmatmul.mubr.f32.gmra.mxu0 %v476
    %v478 = vpop.f32.mrf.mxu0
    %v479 = vadd.f32 %v390, %v478
    %v480 = vpop.f32.mrf.mxu0
    %481 = vdwg.mxu0
    %482 = vmatprep.subr.mxu0 0.0
    %v483 = vand.u32 %v46, 4294901760
    %v484 = vsub.f32 %v46, %v483
    %v485 = vand.u32 %v484, 4294901760
    %486 = vmatpush1.msra.mxu0 %v485
    %487 = vmatprep.subr.mxu0 0.0
    %v488 = vand.u32 %v45, 4294901760
    %v489 = vsub.f32 %v45, %v488
    %v490 = vand.u32 %v489, 4294901760
    %491 = vmatpush1.msra.mxu0 %v490
    %492 = vmatprep.subr.mxu0 0.0
    %v493 = vand.u32 %v44, 4294901760
    %v494 = vsub.f32 %v44, %v493
    %v495 = vand.u32 %v494, 4294901760
    %496 = vmatpush1.msra.mxu0 %v495
    %497 = vmatprep.subr.mxu0 0.0
    %v498 = vand.u32 %v43, 4294901760
    %v499 = vsub.f32 %v43, %v498
    %v500 = vand.u32 %v499, 4294901760
    %501 = vmatpush1.msra.mxu0 %v500
    %502 = vmatprep.subr.mxu0 0.0
    %v503 = vand.u32 %v42, 4294901760
    %v504 = vsub.f32 %v42, %v503
    %v505 = vand.u32 %v504, 4294901760
    %506 = vmatpush1.msra.mxu0 %v505
    %507 = vmatprep.subr.mxu0 0.0
    %v508 = vand.u32 %v41, 4294901760
    %v509 = vsub.f32 %v41, %v508
    %v510 = vand.u32 %v509, 4294901760
    %511 = vmatpush1.msra.mxu0 %v510
    %512 = vmatprep.subr.mxu0 0.0
    %v513 = vand.u32 %v40, 4294901760
    %v514 = vsub.f32 %v40, %v513
    %v515 = vand.u32 %v514, 4294901760
    %516 = vmatpush1.msra.mxu0 %v515
    %517 = vmatprep.subr.mxu0 0.0
    %v518 = vand.u32 %v39, 4294901760
    %v519 = vsub.f32 %v39, %v518
    %v520 = vand.u32 %v519, 4294901760
    %521 = vmatpush1.msra.mxu0 %v520
    %522 = vmatprep.subr.mxu0 0.0
    %v523 = vand.u32 %v38, 4294901760
    %v524 = vsub.f32 %v38, %v523
    %v525 = vand.u32 %v524, 4294901760
    %526 = vmatpush1.msra.mxu0 %v525
    %527 = vmatprep.subr.mxu0 0.0
    %v528 = vand.u32 %v37, 4294901760
    %v529 = vsub.f32 %v37, %v528
    %v530 = vand.u32 %v529, 4294901760
    %531 = vmatpush1.msra.mxu0 %v530
    %532 = vmatprep.subr.mxu0 0.0
    %v533 = vand.u32 %v36, 4294901760
    %v534 = vsub.f32 %v36, %v533
    %v535 = vand.u32 %v534, 4294901760
    %536 = vmatpush1.msra.mxu0 %v535
    %537 = vmatprep.subr.mxu0 0.0
    %v538 = vand.u32 %v35, 4294901760
    %v539 = vsub.f32 %v35, %v538
    %v540 = vand.u32 %v539, 4294901760
    %541 = vmatpush1.msra.mxu0 %v540
    %542 = vmatprep.subr.mxu0 0.0
    %v543 = vand.u32 %v34, 4294901760
    %v544 = vsub.f32 %v34, %v543
    %v545 = vand.u32 %v544, 4294901760
    %546 = vmatpush1.msra.mxu0 %v545
    %547 = vmatprep.subr.mxu0 0.0
    %v548 = vand.u32 %v33, 4294901760
    %v549 = vsub.f32 %v33, %v548
    %v550 = vand.u32 %v549, 4294901760
    %551 = vmatpush1.msra.mxu0 %v550
    %552 = vmatprep.subr.mxu0 0.0
    %v553 = vand.u32 %v32, 4294901760
    %v554 = vsub.f32 %v32, %v553
    %v555 = vand.u32 %v554, 4294901760
    %556 = vmatpush1.msra.mxu0 %v555
    %557 = vmatprep.subr.mxu0 0.0
    %v558 = vand.u32 %v31, 4294901760
    %v559 = vsub.f32 %v31, %v558
    %v560 = vand.u32 %v559, 4294901760
    %561 = vmatpush1.msra.mxu0 %v560
    %562 = vmatprep.subr.mxu0 0.0
    %563 = vmatpush2.msra.mxu0 0.0
    %564 = vmatprep.subr.mxu0 0.0
    %565 = vmatpush2.msra.mxu0 0.0
    %566 = vmatprep.subr.mxu0 0.0
    %567 = vmatpush2.msra.mxu0 0.0
    %568 = vmatprep.subr.mxu0 0.0
    %569 = vmatpush2.msra.mxu0 0.0
    %570 = vmatprep.subr.mxu0 0.0
    %571 = vmatpush2.msra.mxu0 0.0
    %572 = vmatprep.subr.mxu0 0.0
    %573 = vmatpush2.msra.mxu0 0.0
    %574 = vmatprep.subr.mxu0 0.0
    %575 = vmatpush2.msra.mxu0 0.0
    %576 = vmatprep.subr.mxu0 0.0
    %577 = vmatpush2.msra.mxu0 0.0
    %578 = vmatprep.subr.mxu0 0.0
    %579 = vmatpush2.msra.mxu0 0.0
    %580 = vmatprep.subr.mxu0 0.0
    %581 = vmatpush2.msra.mxu0 0.0
    %582 = vmatprep.subr.mxu0 0.0
    %583 = vmatpush2.msra.mxu0 0.0
    %584 = vmatprep.subr.mxu0 0.0
    %585 = vmatpush2.msra.mxu0 0.0
    %586 = vmatprep.subr.mxu0 0.0
    %587 = vmatpush2.msra.mxu0 0.0
    %588 = vmatprep.subr.mxu0 0.0
    %589 = vmatpush2.msra.mxu0 0.0
    %590 = vmatprep.subr.mxu0 0.0
    %591 = vmatpush2.msra.mxu0 0.0
    %592 = vmatprep.subr.mxu0 0.0
    %593 = vmatpush2.msra.mxu0 0.0
    %594 = vmatprep.mubr.f32.mxu0 0.0
    %v595 = vand.u32 %v29, 4294901760
    %596 = vmatmul.mubr.f32.gmra.mxu0 %v595
    %v597 = vpop.f32.mrf.mxu0
    %v598 = vadd.f32 %v479, %v597
    %v599 = vpop.f32.mrf.mxu0
    %600 = vdwg.mxu0
    %601 = vmatprep.subr.mxu0 0.0
    %v602 = vand.u32 %v46, 4294901760
    %603 = vmatpush1.msra.mxu0 %v602
    %604 = vmatprep.subr.mxu0 0.0
    %v605 = vand.u32 %v45, 4294901760
    %606 = vmatpush1.msra.mxu0 %v605
    %607 = vmatprep.subr.mxu0 0.0
    %v608 = vand.u32 %v44, 4294901760
    %609 = vmatpush1.msra.mxu0 %v608
    %610 = vmatprep.subr.mxu0 0.0
    %v611 = vand.u32 %v43, 4294901760
    %612 = vmatpush1.msra.mxu0 %v611
    %613 = vmatprep.subr.mxu0 0.0
    %v614 = vand.u32 %v42, 4294901760
    %615 = vmatpush1.msra.mxu0 %v614
    %616 = vmatprep.subr.mxu0 0.0
    %v617 = vand.u32 %v41, 4294901760
    %618 = vmatpush1.msra.mxu0 %v617
    %619 = vmatprep.subr.mxu0 0.0
    %v620 = vand.u32 %v40, 4294901760
    %621 = vmatpush1.msra.mxu0 %v620
    %622 = vmatprep.subr.mxu0 0.0
    %v623 = vand.u32 %v39, 4294901760
    %624 = vmatpush1.msra.mxu0 %v623
    %625 = vmatprep.subr.mxu0 0.0
    %v626 = vand.u32 %v38, 4294901760
    %627 = vmatpush1.msra.mxu0 %v626
    %628 = vmatprep.subr.mxu0 0.0
    %v629 = vand.u32 %v37, 4294901760
    %630 = vmatpush1.msra.mxu0 %v629
    %631 = vmatprep.subr.mxu0 0.0
    %v632 = vand.u32 %v36, 4294901760
    %633 = vmatpush1.msra.mxu0 %v632
    %634 = vmatprep.subr.mxu0 0.0
    %v635 = vand.u32 %v35, 4294901760
    %636 = vmatpush1.msra.mxu0 %v635
    %637 = vmatprep.subr.mxu0 0.0
    %v638 = vand.u32 %v34, 4294901760
    %639 = vmatpush1.msra.mxu0 %v638
    %640 = vmatprep.subr.mxu0 0.0
    %v641 = vand.u32 %v33, 4294901760
    %642 = vmatpush1.msra.mxu0 %v641
    %643 = vmatprep.subr.mxu0 0.0
    %v644 = vand.u32 %v32, 4294901760
    %645 = vmatpush1.msra.mxu0 %v644
    %646 = vmatprep.subr.mxu0 0.0
    %v647 = vand.u32 %v31, 4294901760
    %648 = vmatpush1.msra.mxu0 %v647
    %649 = vmatprep.subr.mxu0 0.0
    %650 = vmatpush2.msra.mxu0 0.0
    %651 = vmatprep.subr.mxu0 0.0
    %652 = vmatpush2.msra.mxu0 0.0
    %653 = vmatprep.subr.mxu0 0.0
    %654 = vmatpush2.msra.mxu0 0.0
    %655 = vmatprep.subr.mxu0 0.0
    %656 = vmatpush2.msra.mxu0 0.0
    %657 = vmatprep.subr.mxu0 0.0
    %658 = vmatpush2.msra.mxu0 0.0
    %659 = vmatprep.subr.mxu0 0.0
    %660 = vmatpush2.msra.mxu0 0.0
    %661 = vmatprep.subr.mxu0 0.0
    %662 = vmatpush2.msra.mxu0 0.0
    %663 = vmatprep.subr.mxu0 0.0
    %664 = vmatpush2.msra.mxu0 0.0
    %665 = vmatprep.subr.mxu0 0.0
    %666 = vmatpush2.msra.mxu0 0.0
    %667 = vmatprep.subr.mxu0 0.0
    %668 = vmatpush2.msra.mxu0 0.0
    %669 = vmatprep.subr.mxu0 0.0
    %670 = vmatpush2.msra.mxu0 0.0
    %671 = vmatprep.subr.mxu0 0.0
    %672 = vmatpush2.msra.mxu0 0.0
    %673 = vmatprep.subr.mxu0 0.0
    %674 = vmatpush2.msra.mxu0 0.0
    %675 = vmatprep.subr.mxu0 0.0
    %676 = vmatpush2.msra.mxu0 0.0
    %677 = vmatprep.subr.mxu0 0.0
    %678 = vmatpush2.msra.mxu0 0.0
    %679 = vmatprep.subr.mxu0 0.0
    %680 = vmatpush2.msra.mxu0 0.0
    %681 = vmatprep.mubr.f32.mxu0 0.0
    %v682 = vand.u32 %v29, 4294901760
    %683 = vmatmul.mubr.f32.gmra.mxu0 %v682
    %v684 = vpop.f32.mrf.mxu0
    %v685 = vadd.f32 %v598, %v684
    %v686 = vpop.f32.mrf.mxu0
    %687 = vdwg.mxu0
    %688 = vmatprep.subr.mxu0 0.0
    %v689 = vand.u32 %v46, 4294901760
    %690 = vmatpush1.msra.mxu0 %v689
    %691 = vmatprep.subr.mxu0 0.0
    %v692 = vand.u32 %v45, 4294901760
    %693 = vmatpush1.msra.mxu0 %v692
    %694 = vmatprep.subr.mxu0 0.0
    %v695 = vand.u32 %v44, 4294901760
    %696 = vmatpush1.msra.mxu0 %v695
    %697 = vmatprep.subr.mxu0 0.0
    %v698 = vand.u32 %v43, 4294901760
    %699 = vmatpush1.msra.mxu0 %v698
    %700 = vmatprep.subr.mxu0 0.0
    %v701 = vand.u32 %v42, 4294901760
    %702 = vmatpush1.msra.mxu0 %v701
    %703 = vmatprep.subr.mxu0 0.0
    %v704 = vand.u32 %v41, 4294901760
    %705 = vmatpush1.msra.mxu0 %v704
    %706 = vmatprep.subr.mxu0 0.0
    %v707 = vand.u32 %v40, 4294901760
    %708 = vmatpush1.msra.mxu0 %v707
    %709 = vmatprep.subr.mxu0 0.0
    %v710 = vand.u32 %v39, 4294901760
    %711 = vmatpush1.msra.mxu0 %v710
    %712 = vmatprep.subr.mxu0 0.0
    %v713 = vand.u32 %v38, 4294901760
    %714 = vmatpush1.msra.mxu0 %v713
    %715 = vmatprep.subr.mxu0 0.0
    %v716 = vand.u32 %v37, 4294901760
    %717 = vmatpush1.msra.mxu0 %v716
    %718 = vmatprep.subr.mxu0 0.0
    %v719 = vand.u32 %v36, 4294901760
    %720 = vmatpush1.msra.mxu0 %v719
    %721 = vmatprep.subr.mxu0 0.0
    %v722 = vand.u32 %v35, 4294901760
    %723 = vmatpush1.msra.mxu0 %v722
    %724 = vmatprep.subr.mxu0 0.0
    %v725 = vand.u32 %v34, 4294901760
    %726 = vmatpush1.msra.mxu0 %v725
    %727 = vmatprep.subr.mxu0 0.0
    %v728 = vand.u32 %v33, 4294901760
    %729 = vmatpush1.msra.mxu0 %v728
    %730 = vmatprep.subr.mxu0 0.0
    %v731 = vand.u32 %v32, 4294901760
    %732 = vmatpush1.msra.mxu0 %v731
    %733 = vmatprep.subr.mxu0 0.0
    %v734 = vand.u32 %v31, 4294901760
    %735 = vmatpush1.msra.mxu0 %v734
    %736 = vmatprep.subr.mxu0 0.0
    %737 = vmatpush2.msra.mxu0 0.0
    %738 = vmatprep.subr.mxu0 0.0
    %739 = vmatpush2.msra.mxu0 0.0
    %740 = vmatprep.subr.mxu0 0.0
    %741 = vmatpush2.msra.mxu0 0.0
    %742 = vmatprep.subr.mxu0 0.0
    %743 = vmatpush2.msra.mxu0 0.0
    %744 = vmatprep.subr.mxu0 0.0
    %745 = vmatpush2.msra.mxu0 0.0
    %746 = vmatprep.subr.mxu0 0.0
    %747 = vmatpush2.msra.mxu0 0.0
    %748 = vmatprep.subr.mxu0 0.0
    %749 = vmatpush2.msra.mxu0 0.0
    %750 = vmatprep.subr.mxu0 0.0
    %751 = vmatpush2.msra.mxu0 0.0
    %752 = vmatprep.subr.mxu0 0.0
    %753 = vmatpush2.msra.mxu0 0.0
    %754 = vmatprep.subr.mxu0 0.0
    %755 = vmatpush2.msra.mxu0 0.0
    %756 = vmatprep.subr.mxu0 0.0
    %757 = vmatpush2.msra.mxu0 0.0
    %758 = vmatprep.subr.mxu0 0.0
    %759 = vmatpush2.msra.mxu0 0.0
    %760 = vmatprep.subr.mxu0 0.0
    %761 = vmatpush2.msra.mxu0 0.0
    %762 = vmatprep.subr.mxu0 0.0
    %763 = vmatpush2.msra.mxu0 0.0
    %764 = vmatprep.subr.mxu0 0.0
    %765 = vmatpush2.msra.mxu0 0.0
    %766 = vmatprep.subr.mxu0 0.0
    %767 = vmatpush2.msra.mxu0 0.0
    %768 = vmatprep.mubr.f32.mxu0 0.0
    %v769 = vand.u32 %v30, 4294901760
    %v770 = vsub.f32 %v30, %v769
    %v771 = vand.u32 %v770, 4294901760
    %v772 = vsub.f32 %v770, %v771
    %v773 = vand.u32 %v772, 4294901760
    %774 = vmatmul.mubr.f32.gmra.mxu0 %v773
    %v775 = vpop.f32.mrf.mxu0
    %v776 = vadd.f32 0.0, %v775
    %v777 = vpop.f32.mrf.mxu0
    %778 = vdwg.mxu0
    %779 = vmatprep.subr.mxu0 0.0
    %v780 = vand.u32 %v46, 4294901760
    %v781 = vsub.f32 %v46, %v780
    %v782 = vand.u32 %v781, 4294901760
    %v783 = vsub.f32 %v781, %v782
    %v784 = vand.u32 %v783, 4294901760
    %785 = vmatpush1.msra.mxu0 %v784
    %786 = vmatprep.subr.mxu0 0.0
    %v787 = vand.u32 %v45, 4294901760
    %v788 = vsub.f32 %v45, %v787
    %v789 = vand.u32 %v788, 4294901760
    %v790 = vsub.f32 %v788, %v789
    %v791 = vand.u32 %v790, 4294901760
    %792 = vmatpush1.msra.mxu0 %v791
    %793 = vmatprep.subr.mxu0 0.0
    %v794 = vand.u32 %v44, 4294901760
    %v795 = vsub.f32 %v44, %v794
    %v796 = vand.u32 %v795, 4294901760
    %v797 = vsub.f32 %v795, %v796
    %v798 = vand.u32 %v797, 4294901760
    %799 = vmatpush1.msra.mxu0 %v798
    %800 = vmatprep.subr.mxu0 0.0
    %v801 = vand.u32 %v43, 4294901760
    %v802 = vsub.f32 %v43, %v801
    %v803 = vand.u32 %v802, 4294901760
    %v804 = vsub.f32 %v802, %v803
    %v805 = vand.u32 %v804, 4294901760
    %806 = vmatpush1.msra.mxu0 %v805
    %807 = vmatprep.subr.mxu0 0.0
    %v808 = vand.u32 %v42, 4294901760
    %v809 = vsub.f32 %v42, %v808
    %v810 = vand.u32 %v809, 4294901760
    %v811 = vsub.f32 %v809, %v810
    %v812 = vand.u32 %v811, 4294901760
    %813 = vmatpush1.msra.mxu0 %v812
    %814 = vmatprep.subr.mxu0 0.0
    %v815 = vand.u32 %v41, 4294901760
    %v816 = vsub.f32 %v41, %v815
    %v817 = vand.u32 %v816, 4294901760
    %v818 = vsub.f32 %v816, %v817
    %v819 = vand.u32 %v818, 4294901760
    %820 = vmatpush1.msra.mxu0 %v819
    %821 = vmatprep.subr.mxu0 0.0
    %v822 = vand.u32 %v40, 4294901760
    %v823 = vsub.f32 %v40, %v822
    %v824 = vand.u32 %v823, 4294901760
    %v825 = vsub.f32 %v823, %v824
    %v826 = vand.u32 %v825, 4294901760
    %827 = vmatpush1.msra.mxu0 %v826
    %828 = vmatprep.subr.mxu0 0.0
    %v829 = vand.u32 %v39, 4294901760
    %v830 = vsub.f32 %v39, %v829
    %v831 = vand.u32 %v830, 4294901760
    %v832 = vsub.f32 %v830, %v831
    %v833 = vand.u32 %v832, 4294901760
    %834 = vmatpush1.msra.mxu0 %v833
    %835 = vmatprep.subr.mxu0 0.0
    %v836 = vand.u32 %v38, 4294901760
    %v837 = vsub.f32 %v38, %v836
    %v838 = vand.u32 %v837, 4294901760
    %v839 = vsub.f32 %v837, %v838
    %v840 = vand.u32 %v839, 4294901760
    %841 = vmatpush1.msra.mxu0 %v840
    %842 = vmatprep.subr.mxu0 0.0
    %v843 = vand.u32 %v37, 4294901760
    %v844 = vsub.f32 %v37, %v843
    %v845 = vand.u32 %v844, 4294901760
    %v846 = vsub.f32 %v844, %v845
    %v847 = vand.u32 %v846, 4294901760
    %848 = vmatpush1.msra.mxu0 %v847
    %849 = vmatprep.subr.mxu0 0.0
    %v850 = vand.u32 %v36, 4294901760
    %v851 = vsub.f32 %v36, %v850
    %v852 = vand.u32 %v851, 4294901760
    %v853 = vsub.f32 %v851, %v852
    %v854 = vand.u32 %v853, 4294901760
    %855 = vmatpush1.msra.mxu0 %v854
    %856 = vmatprep.subr.mxu0 0.0
    %v857 = vand.u32 %v35, 4294901760
    %v858 = vsub.f32 %v35, %v857
    %v859 = vand.u32 %v858, 4294901760
    %v860 = vsub.f32 %v858, %v859
    %v861 = vand.u32 %v860, 4294901760
    %862 = vmatpush1.msra.mxu0 %v861
    %863 = vmatprep.subr.mxu0 0.0
    %v864 = vand.u32 %v34, 4294901760
    %v865 = vsub.f32 %v34, %v864
    %v866 = vand.u32 %v865, 4294901760
    %v867 = vsub.f32 %v865, %v866
    %v868 = vand.u32 %v867, 4294901760
    %869 = vmatpush1.msra.mxu0 %v868
    %870 = vmatprep.subr.mxu0 0.0
    %v871 = vand.u32 %v33, 4294901760
    %v872 = vsub.f32 %v33, %v871
    %v873 = vand.u32 %v872, 4294901760
    %v874 = vsub.f32 %v872, %v873
    %v875 = vand.u32 %v874, 4294901760
    %876 = vmatpush1.msra.mxu0 %v875
    %877 = vmatprep.subr.mxu0 0.0
    %v878 = vand.u32 %v32, 4294901760
    %v879 = vsub.f32 %v32, %v878
    %v880 = vand.u32 %v879, 4294901760
    %v881 = vsub.f32 %v879, %v880
    %v882 = vand.u32 %v881, 4294901760
    %883 = vmatpush1.msra.mxu0 %v882
    %884 = vmatprep.subr.mxu0 0.0
    %v885 = vand.u32 %v31, 4294901760
    %v886 = vsub.f32 %v31, %v885
    %v887 = vand.u32 %v886, 4294901760
    %v888 = vsub.f32 %v886, %v887
    %v889 = vand.u32 %v888, 4294901760
    %890 = vmatpush1.msra.mxu0 %v889
    %891 = vmatprep.subr.mxu0 0.0
    %892 = vmatpush2.msra.mxu0 0.0
    %893 = vmatprep.subr.mxu0 0.0
    %894 = vmatpush2.msra.mxu0 0.0
    %895 = vmatprep.subr.mxu0 0.0
    %896 = vmatpush2.msra.mxu0 0.0
    %897 = vmatprep.subr.mxu0 0.0
    %898 = vmatpush2.msra.mxu0 0.0
    %899 = vmatprep.subr.mxu0 0.0
    %900 = vmatpush2.msra.mxu0 0.0
    %901 = vmatprep.subr.mxu0 0.0
    %902 = vmatpush2.msra.mxu0 0.0
    %903 = vmatprep.subr.mxu0 0.0
    %904 = vmatpush2.msra.mxu0 0.0
    %905 = vmatprep.subr.mxu0 0.0
    %906 = vmatpush2.msra.mxu0 0.0
    %907 = vmatprep.subr.mxu0 0.0
    %908 = vmatpush2.msra.mxu0 0.0
    %909 = vmatprep.subr.mxu0 0.0
    %910 = vmatpush2.msra.mxu0 0.0
    %911 = vmatprep.subr.mxu0 0.0
    %912 = vmatpush2.msra.mxu0 0.0
    %913 = vmatprep.subr.mxu0 0.0
    %914 = vmatpush2.msra.mxu0 0.0
    %915 = vmatprep.subr.mxu0 0.0
    %916 = vmatpush2.msra.mxu0 0.0
    %917 = vmatprep.subr.mxu0 0.0
    %918 = vmatpush2.msra.mxu0 0.0
    %919 = vmatprep.subr.mxu0 0.0
    %920 = vmatpush2.msra.mxu0 0.0
    %921 = vmatprep.subr.mxu0 0.0
    %922 = vmatpush2.msra.mxu0 0.0
    %923 = vmatprep.mubr.f32.mxu0 0.0
    %v924 = vand.u32 %v30, 4294901760
    %925 = vmatmul.mubr.f32.gmra.mxu0 %v924
    %v926 = vpop.f32.mrf.mxu0
    %v927 = vadd.f32 %v776, %v926
    %v928 = vpop.f32.mrf.mxu0
    %929 = vdwg.mxu0
    %930 = vmatprep.subr.mxu0 0.0
    %v931 = vand.u32 %v46, 4294901760
    %v932 = vsub.f32 %v46, %v931
    %933 = vmatpush1.msra.mxu0 %v932
    %934 = vmatprep.subr.mxu0 0.0
    %v935 = vand.u32 %v45, 4294901760
    %v936 = vsub.f32 %v45, %v935
    %937 = vmatpush1.msra.mxu0 %v936
    %938 = vmatprep.subr.mxu0 0.0
    %v939 = vand.u32 %v44, 4294901760
    %v940 = vsub.f32 %v44, %v939
    %941 = vmatpush1.msra.mxu0 %v940
    %942 = vmatprep.subr.mxu0 0.0
    %v943 = vand.u32 %v43, 4294901760
    %v944 = vsub.f32 %v43, %v943
    %945 = vmatpush1.msra.mxu0 %v944
    %946 = vmatprep.subr.mxu0 0.0
    %v947 = vand.u32 %v42, 4294901760
    %v948 = vsub.f32 %v42, %v947
    %949 = vmatpush1.msra.mxu0 %v948
    %950 = vmatprep.subr.mxu0 0.0
    %v951 = vand.u32 %v41, 4294901760
    %v952 = vsub.f32 %v41, %v951
    %953 = vmatpush1.msra.mxu0 %v952
    %954 = vmatprep.subr.mxu0 0.0
    %v955 = vand.u32 %v40, 4294901760
    %v956 = vsub.f32 %v40, %v955
    %957 = vmatpush1.msra.mxu0 %v956
    %958 = vmatprep.subr.mxu0 0.0
    %v959 = vand.u32 %v39, 4294901760
    %v960 = vsub.f32 %v39, %v959
    %961 = vmatpush1.msra.mxu0 %v960
    %962 = vmatprep.subr.mxu0 0.0
    %v963 = vand.u32 %v38, 4294901760
    %v964 = vsub.f32 %v38, %v963
    %965 = vmatpush1.msra.mxu0 %v964
    %966 = vmatprep.subr.mxu0 0.0
    %v967 = vand.u32 %v37, 4294901760
    %v968 = vsub.f32 %v37, %v967
    %969 = vmatpush1.msra.mxu0 %v968
    %970 = vmatprep.subr.mxu0 0.0
    %v971 = vand.u32 %v36, 4294901760
    %v972 = vsub.f32 %v36, %v971
    %973 = vmatpush1.msra.mxu0 %v972
    %974 = vmatprep.subr.mxu0 0.0
    %v975 = vand.u32 %v35, 4294901760
    %v976 = vsub.f32 %v35, %v975
    %977 = vmatpush1.msra.mxu0 %v976
    %978 = vmatprep.subr.mxu0 0.0
    %v979 = vand.u32 %v34, 4294901760
    %v980 = vsub.f32 %v34, %v979
    %981 = vmatpush1.msra.mxu0 %v980
    %982 = vmatprep.subr.mxu0 0.0
    %v983 = vand.u32 %v33, 4294901760
    %v984 = vsub.f32 %v33, %v983
    %985 = vmatpush1.msra.mxu0 %v984
    %986 = vmatprep.subr.mxu0 0.0
    %v987 = vand.u32 %v32, 4294901760
    %v988 = vsub.f32 %v32, %v987
    %989 = vmatpush1.msra.mxu0 %v988
    %990 = vmatprep.subr.mxu0 0.0
    %v991 = vand.u32 %v31, 4294901760
    %v992 = vsub.f32 %v31, %v991
    %993 = vmatpush1.msra.mxu0 %v992
    %994 = vmatprep.subr.mxu0 0.0
    %995 = vmatpush2.msra.mxu0 0.0
    %996 = vmatprep.subr.mxu0 0.0
    %997 = vmatpush2.msra.mxu0 0.0
    %998 = vmatprep.subr.mxu0 0.0
    %999 = vmatpush2.msra.mxu0 0.0
    %1000 = vmatprep.subr.mxu0 0.0
    %1001 = vmatpush2.msra.mxu0 0.0
    %1002 = vmatprep.subr.mxu0 0.0
    %1003 = vmatpush2.msra.mxu0 0.0
    %1004 = vmatprep.subr.mxu0 0.0
    %1005 = vmatpush2.msra.mxu0 0.0
    %1006 = vmatprep.subr.mxu0 0.0
    %1007 = vmatpush2.msra.mxu0 0.0
    %1008 = vmatprep.subr.mxu0 0.0
    %1009 = vmatpush2.msra.mxu0 0.0
    %1010 = vmatprep.subr.mxu0 0.0
    %1011 = vmatpush2.msra.mxu0 0.0
    %1012 = vmatprep.subr.mxu0 0.0
    %1013 = vmatpush2.msra.mxu0 0.0
    %1014 = vmatprep.subr.mxu0 0.0
    %1015 = vmatpush2.msra.mxu0 0.0
    %1016 = vmatprep.subr.mxu0 0.0
    %1017 = vmatpush2.msra.mxu0 0.0
    %1018 = vmatprep.subr.mxu0 0.0
    %1019 = vmatpush2.msra.mxu0 0.0
    %1020 = vmatprep.subr.mxu0 0.0
    %1021 = vmatpush2.msra.mxu0 0.0
    %1022 = vmatprep.subr.mxu0 0.0
    %1023 = vmatpush2.msra.mxu0 0.0
    %1024 = vmatprep.subr.mxu0 0.0
    %1025 = vmatpush2.msra.mxu0 0.0
    %1026 = vmatprep.mubr.f32.mxu0 0.0
    %v1027 = vand.u32 %v30, 4294901760
    %v1028 = vsub.f32 %v30, %v1027
    %1029 = vmatmul.mubr.f32.gmra.mxu0 %v1028
    %v1030 = vpop.f32.mrf.mxu0
    %v1031 = vadd.f32 %v927, %v1030
    %v1032 = vpop.f32.mrf.mxu0
    %1033 = vdwg.mxu0
    %1034 = vmatprep.subr.mxu0 0.0
    %v1035 = vand.u32 %v46, 4294901760
    %1036 = vmatpush1.msra.mxu0 %v1035
    %1037 = vmatprep.subr.mxu0 0.0
    %v1038 = vand.u32 %v45, 4294901760
    %1039 = vmatpush1.msra.mxu0 %v1038
    %1040 = vmatprep.subr.mxu0 0.0
    %v1041 = vand.u32 %v44, 4294901760
    %1042 = vmatpush1.msra.mxu0 %v1041
    %1043 = vmatprep.subr.mxu0 0.0
    %v1044 = vand.u32 %v43, 4294901760
    %1045 = vmatpush1.msra.mxu0 %v1044
    %1046 = vmatprep.subr.mxu0 0.0
    %v1047 = vand.u32 %v42, 4294901760
    %1048 = vmatpush1.msra.mxu0 %v1047
    %1049 = vmatprep.subr.mxu0 0.0
    %v1050 = vand.u32 %v41, 4294901760
    %1051 = vmatpush1.msra.mxu0 %v1050
    %1052 = vmatprep.subr.mxu0 0.0
    %v1053 = vand.u32 %v40, 4294901760
    %1054 = vmatpush1.msra.mxu0 %v1053
    %1055 = vmatprep.subr.mxu0 0.0
    %v1056 = vand.u32 %v39, 4294901760
    %1057 = vmatpush1.msra.mxu0 %v1056
    %1058 = vmatprep.subr.mxu0 0.0
    %v1059 = vand.u32 %v38, 4294901760
    %1060 = vmatpush1.msra.mxu0 %v1059
    %1061 = vmatprep.subr.mxu0 0.0
    %v1062 = vand.u32 %v37, 4294901760
    %1063 = vmatpush1.msra.mxu0 %v1062
    %1064 = vmatprep.subr.mxu0 0.0
    %v1065 = vand.u32 %v36, 4294901760
    %1066 = vmatpush1.msra.mxu0 %v1065
    %1067 = vmatprep.subr.mxu0 0.0
    %v1068 = vand.u32 %v35, 4294901760
    %1069 = vmatpush1.msra.mxu0 %v1068
    %1070 = vmatprep.subr.mxu0 0.0
    %v1071 = vand.u32 %v34, 4294901760
    %1072 = vmatpush1.msra.mxu0 %v1071
    %1073 = vmatprep.subr.mxu0 0.0
    %v1074 = vand.u32 %v33, 4294901760
    %1075 = vmatpush1.msra.mxu0 %v1074
    %1076 = vmatprep.subr.mxu0 0.0
    %v1077 = vand.u32 %v32, 4294901760
    %1078 = vmatpush1.msra.mxu0 %v1077
    %1079 = vmatprep.subr.mxu0 0.0
    %v1080 = vand.u32 %v31, 4294901760
    %1081 = vmatpush1.msra.mxu0 %v1080
    %1082 = vmatprep.subr.mxu0 0.0
    %1083 = vmatpush2.msra.mxu0 0.0
    %1084 = vmatprep.subr.mxu0 0.0
    %1085 = vmatpush2.msra.mxu0 0.0
    %1086 = vmatprep.subr.mxu0 0.0
    %1087 = vmatpush2.msra.mxu0 0.0
    %1088 = vmatprep.subr.mxu0 0.0
    %1089 = vmatpush2.msra.mxu0 0.0
    %1090 = vmatprep.subr.mxu0 0.0
    %1091 = vmatpush2.msra.mxu0 0.0
    %1092 = vmatprep.subr.mxu0 0.0
    %1093 = vmatpush2.msra.mxu0 0.0
    %1094 = vmatprep.subr.mxu0 0.0
    %1095 = vmatpush2.msra.mxu0 0.0
    %1096 = vmatprep.subr.mxu0 0.0
    %1097 = vmatpush2.msra.mxu0 0.0
    %1098 = vmatprep.subr.mxu0 0.0
    %1099 = vmatpush2.msra.mxu0 0.0
    %1100 = vmatprep.subr.mxu0 0.0
    %1101 = vmatpush2.msra.mxu0 0.0
    %1102 = vmatprep.subr.mxu0 0.0
    %1103 = vmatpush2.msra.mxu0 0.0
    %1104 = vmatprep.subr.mxu0 0.0
    %1105 = vmatpush2.msra.mxu0 0.0
    %1106 = vmatprep.subr.mxu0 0.0
    %1107 = vmatpush2.msra.mxu0 0.0
    %1108 = vmatprep.subr.mxu0 0.0
    %1109 = vmatpush2.msra.mxu0 0.0
    %1110 = vmatprep.subr.mxu0 0.0
    %1111 = vmatpush2.msra.mxu0 0.0
    %1112 = vmatprep.subr.mxu0 0.0
    %1113 = vmatpush2.msra.mxu0 0.0
    %1114 = vmatprep.mubr.f32.mxu0 0.0
    %v1115 = vand.u32 %v30, 4294901760
    %v1116 = vsub.f32 %v30, %v1115
    %v1117 = vand.u32 %v1116, 4294901760
    %1118 = vmatmul.mubr.f32.gmra.mxu0 %v1117
    %v1119 = vpop.f32.mrf.mxu0
    %v1120 = vadd.f32 %v1031, %v1119
    %v1121 = vpop.f32.mrf.mxu0
    %1122 = vdwg.mxu0
    %1123 = vmatprep.subr.mxu0 0.0
    %v1124 = vand.u32 %v46, 4294901760
    %v1125 = vsub.f32 %v46, %v1124
    %v1126 = vand.u32 %v1125, 4294901760
    %1127 = vmatpush1.msra.mxu0 %v1126
    %1128 = vmatprep.subr.mxu0 0.0
    %v1129 = vand.u32 %v45, 4294901760
    %v1130 = vsub.f32 %v45, %v1129
    %v1131 = vand.u32 %v1130, 4294901760
    %1132 = vmatpush1.msra.mxu0 %v1131
    %1133 = vmatprep.subr.mxu0 0.0
    %v1134 = vand.u32 %v44, 4294901760
    %v1135 = vsub.f32 %v44, %v1134
    %v1136 = vand.u32 %v1135, 4294901760
    %1137 = vmatpush1.msra.mxu0 %v1136
    %1138 = vmatprep.subr.mxu0 0.0
    %v1139 = vand.u32 %v43, 4294901760
    %v1140 = vsub.f32 %v43, %v1139
    %v1141 = vand.u32 %v1140, 4294901760
    %1142 = vmatpush1.msra.mxu0 %v1141
    %1143 = vmatprep.subr.mxu0 0.0
    %v1144 = vand.u32 %v42, 4294901760
    %v1145 = vsub.f32 %v42, %v1144
    %v1146 = vand.u32 %v1145, 4294901760
    %1147 = vmatpush1.msra.mxu0 %v1146
    %1148 = vmatprep.subr.mxu0 0.0
    %v1149 = vand.u32 %v41, 4294901760
    %v1150 = vsub.f32 %v41, %v1149
    %v1151 = vand.u32 %v1150, 4294901760
    %1152 = vmatpush1.msra.mxu0 %v1151
    %1153 = vmatprep.subr.mxu0 0.0
    %v1154 = vand.u32 %v40, 4294901760
    %v1155 = vsub.f32 %v40, %v1154
    %v1156 = vand.u32 %v1155, 4294901760
    %1157 = vmatpush1.msra.mxu0 %v1156
    %1158 = vmatprep.subr.mxu0 0.0
    %v1159 = vand.u32 %v39, 4294901760
    %v1160 = vsub.f32 %v39, %v1159
    %v1161 = vand.u32 %v1160, 4294901760
    %1162 = vmatpush1.msra.mxu0 %v1161
    %1163 = vmatprep.subr.mxu0 0.0
    %v1164 = vand.u32 %v38, 4294901760
    %v1165 = vsub.f32 %v38, %v1164
    %v1166 = vand.u32 %v1165, 4294901760
    %1167 = vmatpush1.msra.mxu0 %v1166
    %1168 = vmatprep.subr.mxu0 0.0
    %v1169 = vand.u32 %v37, 4294901760
    %v1170 = vsub.f32 %v37, %v1169
    %v1171 = vand.u32 %v1170, 4294901760
    %1172 = vmatpush1.msra.mxu0 %v1171
    %1173 = vmatprep.subr.mxu0 0.0
    %v1174 = vand.u32 %v36, 4294901760
    %v1175 = vsub.f32 %v36, %v1174
    %v1176 = vand.u32 %v1175, 4294901760
    %1177 = vmatpush1.msra.mxu0 %v1176
    %1178 = vmatprep.subr.mxu0 0.0
    %v1179 = vand.u32 %v35, 4294901760
    %v1180 = vsub.f32 %v35, %v1179
    %v1181 = vand.u32 %v1180, 4294901760
    %1182 = vmatpush1.msra.mxu0 %v1181
    %1183 = vmatprep.subr.mxu0 0.0
    %v1184 = vand.u32 %v34, 4294901760
    %v1185 = vsub.f32 %v34, %v1184
    %v1186 = vand.u32 %v1185, 4294901760
    %1187 = vmatpush1.msra.mxu0 %v1186
    %1188 = vmatprep.subr.mxu0 0.0
    %v1189 = vand.u32 %v33, 4294901760
    %v1190 = vsub.f32 %v33, %v1189
    %v1191 = vand.u32 %v1190, 4294901760
    %1192 = vmatpush1.msra.mxu0 %v1191
    %1193 = vmatprep.subr.mxu0 0.0
    %v1194 = vand.u32 %v32, 4294901760
    %v1195 = vsub.f32 %v32, %v1194
    %v1196 = vand.u32 %v1195, 4294901760
    %1197 = vmatpush1.msra.mxu0 %v1196
    %1198 = vmatprep.subr.mxu0 0.0
    %v1199 = vand.u32 %v31, 4294901760
    %v1200 = vsub.f32 %v31, %v1199
    %v1201 = vand.u32 %v1200, 4294901760
    %1202 = vmatpush1.msra.mxu0 %v1201
    %1203 = vmatprep.subr.mxu0 0.0
    %1204 = vmatpush2.msra.mxu0 0.0
    %1205 = vmatprep.subr.mxu0 0.0
    %1206 = vmatpush2.msra.mxu0 0.0
    %1207 = vmatprep.subr.mxu0 0.0
    %1208 = vmatpush2.msra.mxu0 0.0
    %1209 = vmatprep.subr.mxu0 0.0
    %1210 = vmatpush2.msra.mxu0 0.0
    %1211 = vmatprep.subr.mxu0 0.0
    %1212 = vmatpush2.msra.mxu0 0.0
    %1213 = vmatprep.subr.mxu0 0.0
    %1214 = vmatpush2.msra.mxu0 0.0
    %1215 = vmatprep.subr.mxu0 0.0
    %1216 = vmatpush2.msra.mxu0 0.0
    %1217 = vmatprep.subr.mxu0 0.0
    %1218 = vmatpush2.msra.mxu0 0.0
    %1219 = vmatprep.subr.mxu0 0.0
    %1220 = vmatpush2.msra.mxu0 0.0
    %1221 = vmatprep.subr.mxu0 0.0
    %1222 = vmatpush2.msra.mxu0 0.0
    %1223 = vmatprep.subr.mxu0 0.0
    %1224 = vmatpush2.msra.mxu0 0.0
    %1225 = vmatprep.subr.mxu0 0.0
    %1226 = vmatpush2.msra.mxu0 0.0
    %1227 = vmatprep.subr.mxu0 0.0
    %1228 = vmatpush2.msra.mxu0 0.0
    %1229 = vmatprep.subr.mxu0 0.0
    %1230 = vmatpush2.msra.mxu0 0.0
    %1231 = vmatprep.subr.mxu0 0.0
    %1232 = vmatpush2.msra.mxu0 0.0
    %1233 = vmatprep.subr.mxu0 0.0
    %1234 = vmatpush2.msra.mxu0 0.0
    %1235 = vmatprep.mubr.f32.mxu0 0.0
    %v1236 = vand.u32 %v30, 4294901760
    %1237 = vmatmul.mubr.f32.gmra.mxu0 %v1236
    %v1238 = vpop.f32.mrf.mxu0
    %v1239 = vadd.f32 %v1120, %v1238
    %v1240 = vpop.f32.mrf.mxu0
    %1241 = vdwg.mxu0
    %1242 = vmatprep.subr.mxu0 0.0
    %v1243 = vand.u32 %v46, 4294901760
    %1244 = vmatpush1.msra.mxu0 %v1243
    %1245 = vmatprep.subr.mxu0 0.0
    %v1246 = vand.u32 %v45, 4294901760
    %1247 = vmatpush1.msra.mxu0 %v1246
    %1248 = vmatprep.subr.mxu0 0.0
    %v1249 = vand.u32 %v44, 4294901760
    %1250 = vmatpush1.msra.mxu0 %v1249
    %1251 = vmatprep.subr.mxu0 0.0
    %v1252 = vand.u32 %v43, 4294901760
    %1253 = vmatpush1.msra.mxu0 %v1252
    %1254 = vmatprep.subr.mxu0 0.0
    %v1255 = vand.u32 %v42, 4294901760
    %1256 = vmatpush1.msra.mxu0 %v1255
    %1257 = vmatprep.subr.mxu0 0.0
    %v1258 = vand.u32 %v41, 4294901760
    %1259 = vmatpush1.msra.mxu0 %v1258
    %1260 = vmatprep.subr.mxu0 0.0
    %v1261 = vand.u32 %v40, 4294901760
    %1262 = vmatpush1.msra.mxu0 %v1261
    %1263 = vmatprep.subr.mxu0 0.0
    %v1264 = vand.u32 %v39, 4294901760
    %1265 = vmatpush1.msra.mxu0 %v1264
    %1266 = vmatprep.subr.mxu0 0.0
    %v1267 = vand.u32 %v38, 4294901760
    %1268 = vmatpush1.msra.mxu0 %v1267
    %1269 = vmatprep.subr.mxu0 0.0
    %v1270 = vand.u32 %v37, 4294901760
    %1271 = vmatpush1.msra.mxu0 %v1270
    %1272 = vmatprep.subr.mxu0 0.0
    %v1273 = vand.u32 %v36, 4294901760
    %1274 = vmatpush1.msra.mxu0 %v1273
    %1275 = vmatprep.subr.mxu0 0.0
    %v1276 = vand.u32 %v35, 4294901760
    %1277 = vmatpush1.msra.mxu0 %v1276
    %1278 = vmatprep.subr.mxu0 0.0
    %v1279 = vand.u32 %v34, 4294901760
    %1280 = vmatpush1.msra.mxu0 %v1279
    %1281 = vmatprep.subr.mxu0 0.0
    %v1282 = vand.u32 %v33, 4294901760
    %1283 = vmatpush1.msra.mxu0 %v1282
    %1284 = vmatprep.subr.mxu0 0.0
    %v1285 = vand.u32 %v32, 4294901760
    %1286 = vmatpush1.msra.mxu0 %v1285
    %1287 = vmatprep.subr.mxu0 0.0
    %v1288 = vand.u32 %v31, 4294901760
    %1289 = vmatpush1.msra.mxu0 %v1288
    %1290 = vmatprep.subr.mxu0 0.0
    %1291 = vmatpush2.msra.mxu0 0.0
    %1292 = vmatprep.subr.mxu0 0.0
    %1293 = vmatpush2.msra.mxu0 0.0
    %1294 = vmatprep.subr.mxu0 0.0
    %1295 = vmatpush2.msra.mxu0 0.0
    %1296 = vmatprep.subr.mxu0 0.0
    %1297 = vmatpush2.msra.mxu0 0.0
    %1298 = vmatprep.subr.mxu0 0.0
    %1299 = vmatpush2.msra.mxu0 0.0
    %1300 = vmatprep.subr.mxu0 0.0
    %1301 = vmatpush2.msra.mxu0 0.0
    %1302 = vmatprep.subr.mxu0 0.0
    %1303 = vmatpush2.msra.mxu0 0.0
    %1304 = vmatprep.subr.mxu0 0.0
    %1305 = vmatpush2.msra.mxu0 0.0
    %1306 = vmatprep.subr.mxu0 0.0
    %1307 = vmatpush2.msra.mxu0 0.0
    %1308 = vmatprep.subr.mxu0 0.0
    %1309 = vmatpush2.msra.mxu0 0.0
    %1310 = vmatprep.subr.mxu0 0.0
    %1311 = vmatpush2.msra.mxu0 0.0
    %1312 = vmatprep.subr.mxu0 0.0
    %1313 = vmatpush2.msra.mxu0 0.0
    %1314 = vmatprep.subr.mxu0 0.0
    %1315 = vmatpush2.msra.mxu0 0.0
    %1316 = vmatprep.subr.mxu0 0.0
    %1317 = vmatpush2.msra.mxu0 0.0
    %1318 = vmatprep.subr.mxu0 0.0
    %1319 = vmatpush2.msra.mxu0 0.0
    %1320 = vmatprep.subr.mxu0 0.0
    %1321 = vmatpush2.msra.mxu0 0.0
    %1322 = vmatprep.mubr.f32.mxu0 0.0
    %v1323 = vand.u32 %v30, 4294901760
    %1324 = vmatmul.mubr.f32.gmra.mxu0 %v1323
    %v1325 = vpop.f32.mrf.mxu0
    %v1326 = vadd.f32 %v1239, %v1325
    %v1327 = vpop.f32.mrf.mxu0
    %1328 = vdwg.mxu0
    %v1329 = vsub.f32 %v685, %v1326
    %v1330 = vmul.f32 %v1329, %v1329
    %v1331 = vsub.f32 0.0, %v1330
    %v1332 = vmul.f32 %v1331, 1.442695
    %v1333 = vpow.pop %v1332
    %v1334 = vmul.f32 %v1333, 0.5
    %v1335 = vadd.f32 %v685, %v1326
    %v1336 = vmul.f32 %v1334, %v1335
    %v1337 = vmul.f32 %v1330, 0.5
    %v1338 = vadd.f32 %v1336, %v1337
    %vm1339 = vcmask 25600
    %v1340 = vsel %vm1339, %v1338, 0.0
    %v1341 = vrot.slane %v1340, 4
    %v1342 = vadd.f32 %v1340, %v1341
    %v1343 = vrot.slane %v1342, 2
    %v1344 = vadd.f32 %v1342, %v1343
    %v1345 = vrot.slane %v1344, 1
    %v1346 = vadd.f32 %v1344, %v1345
    %vm1347 = vcmask 24576
    %1348 = vst.msk [vmem:[#allocation2] sm:$0x1] %vm1347, %v1346
    // Predicated region
    $region18: #{tpu_custom_call.1} parent=1 // pred_check
      _
    $region19: #{tpu_custom_call.1} parent=1 // pred_check_branch
      %1350 = sbr.rel (0) target = $region21
    $region20: #{tpu_custom_call.1} parent=1 // pred_region
      %s1352 = ssub.s32 16, 16
      %1353 = vsyncadd [#allocation3], %s1352
      %s1355 = sshll.u32 [#allocation2], 4
      %s1356 = int_to_ptr.vmem [resolvable:$true] %s1355
      %1358 = dma.vmem_to_hbm [thread:$0]  %s1356, 16, %s4, [#allocation3]
    $region21: #{tpu_custom_call.1} parent=1 // pred_fallthru
      _
    // Predicated region
    $region22: #{tpu_custom_call.1} parent=1 // pred_check
      _
    $region23: #{tpu_custom_call.1} parent=1 // pred_check_branch
      %1360 = sbr.rel (0) target = $region25
    $region24: #{tpu_custom_call.1} parent=1 // pred_region
      %1361 = dma.done [#allocation3], 16
    $region25: #{tpu_custom_call.1} parent=1 // pred_fallthru
      _
    %1362 = vsyncpa [#allocation3], 1

</llo_original>
